<compile_context>
chip_gen: v5e
topology: v5e:2x2
jax: 0.10.0
libtpu: 0.0.40
codegen_flags: <defaults>
</compile_context>

<pallas_src>
import functools
import math
from enum import Enum

import jax
import jax.numpy as jnp
import numpy as np
from jax import lax
from jax.experimental import pallas as pl
from jax.experimental.pallas import tpu as pltpu


class FeatureSet(Enum):
    HBP = "hbp"    # head/body pose only
    HBPS = "hbps"  # head/body pose + speaking status (trailing logit column)


def _round_up(x: int, m: int) -> int:
    return ((x + m - 1) // m) * m


def _lcm(a: int, b: int) -> int:
    return a * b // math.gcd(a, b)


# BCE(x=-1e4, y=0) == 0 exactly in f32 (exp(-1e4) underflows to 0), so this is
# the neutral padding value for the speaking-status logits.
_NEG_BIG = -1.0e4


# ---------------------------------------------------------------------------
# Fused kernel: pose/rot squared-error sums + speaking-status BCE sum
# ---------------------------------------------------------------------------
def _social_aux_kernel(*refs, tile_rows, ss_tile_rows, rows_total,
                       has_ss, use_pose_mask, ragged):
    it = iter(refs)
    pred_ref = next(it)                       # (tile_rows, 128) input dtype
    trg_ref = next(it)
    rot_m_ref = next(it)                      # (tile_rows, 128) f32 0/1, resident
    pose_m_ref = next(it) if use_pose_mask else None
    if has_ss:
        ssx_ref = next(it)                    # (ss_tile_rows, 128) logits
        ssy_ref = next(it)                    # (ss_tile_rows, 128) labels
    out_ref = next(it)                        # (1, 3) f32 SMEM
    acc_pose = next(it)                       # (8, 128) f32
    acc_rot = next(it)                        # (8, 128) f32
    acc_bce = next(it) if has_ss else None    # (8, 128) f32
    lidx = next(it) if ragged else None       # (tile_rows, 128) i32 row indices

    i = pl.program_id(0)

    @pl.when(i == 0)
    def _init():
        acc_pose[...] = jnp.zeros_like(acc_pose)
        acc_rot[...] = jnp.zeros_like(acc_rot)
        if has_ss:
            acc_bce[...] = jnp.zeros_like(acc_bce)
        if ragged:
            # Row-index plane, generated once and reused every step.
            lidx[...] = lax.broadcasted_iota(jnp.int32, (tile_rows, 128), 0)

    # ---- pose / rot squared-error contributions (hot loop) ----
    pred = pred_ref[...].astype(jnp.float32)
    trg = trg_ref[...].astype(jnp.float32)
    diff = pred - trg
    sq = diff * diff
    if ragged:
        # Zero rows that fall beyond the real data (garbage from the partial
        # trailing block).  Row-granular, so no global flat index is needed.
        rows_left = rows_total - i * tile_rows
        sq = jnp.where(lidx[...] < rows_left, sq, 0.0)
    pose_c = sq * pose_m_ref[...] if use_pose_mask else sq
    rot_c = sq * rot_m_ref[...]
    # Fold each tile to (8,128) with pure VPU adds before touching the
    # accumulators (3 small acc streams instead of full-width ones).
    acc_pose[...] += pose_c.reshape(tile_rows // 8, 8, 128).sum(axis=0)
    acc_rot[...] += rot_c.reshape(tile_rows // 8, 8, 128).sum(axis=0)

    # ---- speaking-status BCE on its own small slab ----
    if has_ss:
        x = ssx_ref[...].astype(jnp.float32)
        y = ssy_ref[...].astype(jnp.float32)
        bce = jnp.maximum(x, 0.0) - x * y + jnp.log1p(jnp.exp(-jnp.abs(x)))
        acc_bce[...] += bce.reshape(ss_tile_rows // 8, 8, 128).sum(axis=0)

    @pl.when(i == pl.num_programs(0) - 1)
    def _finalize():
        out_ref[0, 0] = jnp.sum(acc_pose[...])   # sum sq err over all pose dims
        out_ref[0, 1] = jnp.sum(acc_rot[...])    # sum sq err over rot dims
        if has_ss:
            out_ref[0, 2] = jnp.sum(acc_bce[...])
        else:
            out_ref[0, 2] = jnp.float32(0.0)


# ---------------------------------------------------------------------------
# Module forward
# ---------------------------------------------------------------------------
def social_aux_loss(prediction, target, sx, sq, *,
                    nposes: int = 1,
                    feature_set: FeatureSet = FeatureSet.HBPS,
                    tile_rows_target: int = 2048):
    """Forward of SocialAuxLoss (GeometricHomoscedasticLoss + optional BCE)."""
    has_ss = feature_set == FeatureSet.HBPS
    feat = 7 * nposes + (1 if has_ss else 0)
    assert prediction.shape == target.shape
    assert prediction.shape[-1] == feat, (prediction.shape, feat)
    if target.dtype != prediction.dtype:
        target = target.astype(prediction.dtype)

    itemsize = prediction.dtype.itemsize
    sub = max(8, 32 // itemsize)          # sublane granule: 8 f32, 16 bf16, 32 i8

    n_valid = prediction.size
    n_vecs = n_valid // feat

    # ---- main slab: lane-dense (rows, 128) in the NATIVE dtype ----
    # Pad with zeros only up to one sublane granule of rows (zeros are neutral
    # for the MSE sums); when no pad is needed there is no extra HBM copy.
    row_elems = 128 * sub
    P = n_valid if n_valid % row_elems == 0 else _round_up(n_valid, row_elems)
    R = P // 128

    fgrp = feat // math.gcd(feat, 128)
    base = _lcm(sub, fgrp)                # tile_rows multiple => tile_elems % feat == 0
    t_multi = max(base, (tile_rows_target // base) * base)
    if R <= t_multi:
        tile_rows = R                     # single tile, exact fit, never ragged
    else:
        tile_rows = t_multi
    num_tiles = pl.cdiv(R, tile_rows)
    ragged = (R % tile_rows) != 0

    pred_flat = prediction.reshape(-1)
    trg_flat = target.reshape(-1)
    pad = P - n_valid
    if pad:
        pred_flat = jnp.pad(pred_flat, (0, pad))
        trg_flat = jnp.pad(trg_flat, (0, pad))
    pred2d = pred_flat.reshape(R, 128)
    trg2d = trg_flat.reshape(R, 128)

    # ---- grid-invariant rot / pose masks (one tile worth, resident) ----
    tile_elems = tile_rows * 128
    cols = np.arange(tile_elems, dtype=np.int64) % feat
    in_pose = cols < 7 * nposes
    rot = in_pose & ((cols % 7) < 4)
    rot_mask = jnp.asarray(rot.reshape(tile_rows, 128), dtype=jnp.float32)
    use_pose_mask = has_ss                # without ss column every lane is pose

    inputs = [pred2d, trg2d, rot_mask]
    in_specs = [
        pl.BlockSpec((tile_rows, 128), lambda i: (i, 0)),
        pl.BlockSpec((tile_rows, 128), lambda i: (i, 0)),
        pl.BlockSpec((tile_rows, 128), lambda i: (0, 0)),   # loaded once
    ]
    if use_pose_mask:
        pose_mask = jnp.asarray(in_pose.reshape(tile_rows, 128),
                                dtype=jnp.float32)
        inputs.append(pose_mask)
        in_specs.append(pl.BlockSpec((tile_rows, 128), lambda i: (0, 0)))

    # ---- speaking-status slab (1/feat of the data), own lane-dense pack ----
    ss_tile_rows = 0
    if has_ss:
        ss_rows = pl.cdiv(n_vecs, 128)
        ss_tile_rows = max(sub, _round_up(pl.cdiv(ss_rows, num_tiles), sub))
        ss_padded_rows = ss_tile_rows * num_tiles
        ssx = prediction[..., -1].reshape(-1)
        ssy = target[..., -1].reshape(-1)
        ss_pad = ss_padded_rows * 128 - n_vecs
        if ss_pad:
            ssx = jnp.pad(ssx, (0, ss_pad), constant_values=_NEG_BIG)
            ssy = jnp.pad(ssy, (0, ss_pad))
        inputs += [ssx.reshape(ss_padded_rows, 128),
                   ssy.reshape(ss_padded_rows, 128)]
        in_specs += [pl.BlockSpec((ss_tile_rows, 128), lambda i: (i, 0)),
                     pl.BlockSpec((ss_tile_rows, 128), lambda i: (i, 0))]

    scratch = [pltpu.VMEM((8, 128), jnp.float32),     # acc_pose
               pltpu.VMEM((8, 128), jnp.float32)]     # acc_rot
    if has_ss:
        scratch.append(pltpu.VMEM((8, 128), jnp.float32))          # acc_bce
    if ragged:
        scratch.append(pltpu.VMEM((tile_rows, 128), jnp.int32))    # row indices

    kernel = functools.partial(
        _social_aux_kernel, tile_rows=tile_rows, ss_tile_rows=ss_tile_rows,
        rows_total=R, has_ss=has_ss, use_pose_mask=use_pose_mask, ragged=ragged)

    sums = pl.pallas_call(
        kernel,
        out_shape=jax.ShapeDtypeStruct((1, 3), jnp.float32),
        grid=(num_tiles,),
        in_specs=in_specs,
        out_specs=pl.BlockSpec((1, 3), lambda i: (0, 0),
                               memory_space=pltpu.MemorySpace.SMEM),
        scratch_shapes=scratch,
        compiler_params=pltpu.CompilerParams(
            dimension_semantics=("arbitrary",),       # carried accumulator
            vmem_limit_bytes=32 * 1024 * 1024,        # v7x-safe budget
        ),
    )(*inputs)

    # O(1) scalar epilogue on the two learnable parameters (wrapper glue).
    sum_pose = sums[0, 0]
    sum_rot = sums[0, 1]
    loss_rot = sum_rot / jnp.float32(n_vecs * 4 * nposes)             # MSE mean
    loss_pos = (sum_pose - sum_rot) / jnp.float32(n_vecs * 3 * nposes)
    loss = jnp.exp(-sx) * loss_pos + sx + jnp.exp(-sq) * loss_rot + sq
    if has_ss:
        loss = loss + sums[0, 2] / jnp.float32(n_vecs)                # BCE mean
    return loss


# ---------------------------------------------------------------------------
# Pure-JAX reference (mirrors the PyTorch module) for validation
# ---------------------------------------------------------------------------
def _reference(prediction, target, sx, sq, *, nposes, feature_set):
    rot_idx = np.concatenate([np.arange(0, 4) + 7 * p for p in range(nposes)])
    loc_idx = np.concatenate([np.arange(4, 7) + 7 * p for p in range(nposes)])
    loss_rot = jnp.mean((prediction[..., rot_idx] - target[..., rot_idx]) ** 2)
    loss_pos = jnp.mean((prediction[..., loc_idx] - target[..., loc_idx]) ** 2)
    loss = jnp.exp(-sx) * loss_pos + sx + jnp.exp(-sq) * loss_rot + sq
    if feature_set == FeatureSet.HBPS:
        x = prediction[..., -1]
        y = target[..., -1]
        bce = jnp.maximum(x, 0.0) - x * y + jnp.log1p(jnp.exp(-jnp.abs(x)))
        loss = loss + jnp.mean(bce)
    return loss


# ---------------------------------------------------------------------------
if __name__ == "__main__":
    key = jax.random.PRNGKey(0)

    def run_case(shape, nposes, feature_set, k, dtype=jnp.float32,
                 tile_rows_target=2048, tol=1e-4):
        k1, k2 = jax.random.split(k)
        pred = jax.random.normal(k1, shape, jnp.float32).astype(dtype)
        trg = jax.random.normal(k2, shape, jnp.float32).astype(dtype)
        sx = jnp.float32(0.1)       # homoscedastic position uncertainty
        sq = jnp.float32(-3.0)      # homoscedastic orientation uncertainty
        got = social_aux_loss(pred, trg, sx, sq, nposes=nposes,
                              feature_set=feature_set,
                              tile_rows_target=tile_rows_target)
        got = jax.block_until_ready(got)
        want = _reference(pred.astype(jnp.float32), trg.astype(jnp.float32),
                          sx, sq, nposes=nposes, feature_set=feature_set)
        assert jnp.allclose(got, want, rtol=tol, atol=tol), \
            (shape, dtype, got, want)

    ks = jax.random.split(key, 5)
    # seq=16, batch=8, nposes=2 + speaking status -> feat=15 (single-tile path).
    run_case((16, 8, 15), 2, FeatureSet.HBPS, ks[0])
    # seq=8, batch=4, nposes=1 + speaking status -> feat=8.
    run_case((8, 4, 8), 1, FeatureSet.HBPS, ks[1])
    # Pose-only feature set (no BCE term, no pose mask needed).
    run_case((8, 4, 7), 1, FeatureSet.HBP, ks[2])
    # Multi-tile, ragged last tile: grid-invariant masks + row-valid select.
    run_case((64, 20, 15), 2, FeatureSet.HBPS, ks[3], tile_rows_target=16)
    # Multi-tile, no-pad, bf16 passthrough (native-dtype DMA, in-kernel upcast).
    run_case((32, 32, 8), 1, FeatureSet.HBPS, ks[4], dtype=jnp.bfloat16,
             tile_rows_target=16, tol=1e-3)

    print("KERNEL_OK")
</pallas_src>

<mosaic_0001>
module attributes {stable_mosaic.version = 11 : i64} {
  func.func @_social_aux_kernel(%arg0: i32, %arg1: memref<16x128xf32, #tpu.memory_space<vmem>>, %arg2: memref<16x128xf32, #tpu.memory_space<vmem>>, %arg3: memref<16x128xf32, #tpu.memory_space<vmem>>, %arg4: memref<16x128xf32, #tpu.memory_space<vmem>>, %arg5: memref<8x128xf32, #tpu.memory_space<vmem>>, %arg6: memref<8x128xf32, #tpu.memory_space<vmem>>, %arg7: memref<1x3xf32, #tpu.memory_space<smem>>, %arg8: memref<8x128xf32, #tpu.memory_space<vmem>>, %arg9: memref<8x128xf32, #tpu.memory_space<vmem>>, %arg10: memref<8x128xf32, #tpu.memory_space<vmem>>) attributes {dimension_semantics = [#tpu.dimension_semantics<arbitrary>], iteration_bounds = array<i64: 1>, scalar_prefetch = 0 : i64, scratch_operands = 3 : i64, tpu.core_type = #tpu.core_type<tc>, window_params = [{transform_indices = @transform_0, window_bounds = array<i64: 16, 128>}, {transform_indices = @transform_1, window_bounds = array<i64: 16, 128>}, {pipeline_mode = #tpu.pipeline_mode<synchronous>, transform_indices = @transform_2, window_bounds = array<i64: 16, 128>}, {pipeline_mode = #tpu.pipeline_mode<synchronous>, transform_indices = @transform_3, window_bounds = array<i64: 16, 128>}, {transform_indices = @transform_4, window_bounds = array<i64: 8, 128>}, {transform_indices = @transform_5, window_bounds = array<i64: 8, 128>}, {transform_indices = @transform_6, window_bounds = array<i64: 1, 3>}]} {
    %c0_i32 = arith.constant 0 : i32
    %0 = arith.cmpi eq, %arg0, %c0_i32 : i32
    %1 = arith.extui %0 : i1 to i32
    %c0_i32_0 = arith.constant 0 : i32
    %2 = arith.cmpi ne, %1, %c0_i32_0 : i32
    scf.if %2 {
      %cst_30 = arith.constant 0.000000e+00 : f32
      %41 = vector.broadcast %cst_30 : f32 to vector<8x128xf32>
      %c0_31 = arith.constant 0 : index
      %c0_32 = arith.constant 0 : index
      %42 = vector.load %arg8[%c0_31, %c0_32] : memref<8x128xf32, #tpu.memory_space<vmem>>, vector<8x128xf32>
      tpu.vector_store %arg8[%c0_31, %c0_32], %41 {strides = array<i32>} : memref<8x128xf32, #tpu.memory_space<vmem>>, vector<8x128xf32>,
      %cst_33 = arith.constant 0.000000e+00 : f32
      %43 = vector.broadcast %cst_33 : f32 to vector<8x128xf32>
      %c0_34 = arith.constant 0 : index
      %c0_35 = arith.constant 0 : index
      %44 = vector.load %arg9[%c0_34, %c0_35] : memref<8x128xf32, #tpu.memory_space<vmem>>, vector<8x128xf32>
      tpu.vector_store %arg9[%c0_34, %c0_35], %43 {strides = array<i32>} : memref<8x128xf32, #tpu.memory_space<vmem>>, vector<8x128xf32>,
      %cst_36 = arith.constant 0.000000e+00 : f32
      %45 = vector.broadcast %cst_36 : f32 to vector<8x128xf32>
      %c0_37 = arith.constant 0 : index
      %c0_38 = arith.constant 0 : index
      %46 = vector.load %arg10[%c0_37, %c0_38] : memref<8x128xf32, #tpu.memory_space<vmem>>, vector<8x128xf32>
      tpu.vector_store %arg10[%c0_37, %c0_38], %45 {strides = array<i32>} : memref<8x128xf32, #tpu.memory_space<vmem>>, vector<8x128xf32>,
    } else {
    }
    %c0 = arith.constant 0 : index
    %c0_1 = arith.constant 0 : index
    %3 = vector.load %arg1[%c0, %c0_1] : memref<16x128xf32, #tpu.memory_space<vmem>>, vector<16x128xf32>
    %c0_2 = arith.constant 0 : index
    %c0_3 = arith.constant 0 : index
    %4 = vector.load %arg2[%c0_2, %c0_3] : memref<16x128xf32, #tpu.memory_space<vmem>>, vector<16x128xf32>
    %5 = arith.subf %3, %4 : vector<16x128xf32>
    %6 = arith.mulf %5, %5 : vector<16x128xf32>
    %c0_4 = arith.constant 0 : index
    %c0_5 = arith.constant 0 : index
    %7 = vector.load %arg4[%c0_4, %c0_5] : memref<16x128xf32, #tpu.memory_space<vmem>>, vector<16x128xf32>
    %8 = arith.mulf %6, %7 : vector<16x128xf32>
    %c0_6 = arith.constant 0 : index
    %c0_7 = arith.constant 0 : index
    %9 = vector.load %arg3[%c0_6, %c0_7] : memref<16x128xf32, #tpu.memory_space<vmem>>, vector<16x128xf32>
    %10 = arith.mulf %6, %9 : vector<16x128xf32>
    %c0_8 = arith.constant 0 : index
    %c0_9 = arith.constant 0 : index
    %11 = vector.load %arg8[%c0_8, %c0_9] : memref<8x128xf32, #tpu.memory_space<vmem>>, vector<8x128xf32>
    %12 = vector.shape_cast %8 : vector<16x128xf32> to vector<2x8x128xf32>
    %cst = arith.constant dense<0.000000e+00> : vector<8x128xf32>
    %13 = vector.multi_reduction <add>, %12, %cst [0] : vector<2x8x128xf32> to vector<8x128xf32>
    %14 = arith.addf %11, %13 : vector<8x128xf32>
    %c0_10 = arith.constant 0 : index
    %c0_11 = arith.constant 0 : index
    %15 = vector.load %arg8[%c0_10, %c0_11] : memref<8x128xf32, #tpu.memory_space<vmem>>, vector<8x128xf32>
    tpu.vector_store %arg8[%c0_10, %c0_11], %14 {strides = array<i32>} : memref<8x128xf32, #tpu.memory_space<vmem>>, vector<8x128xf32>,
    %c0_12 = arith.constant 0 : index
    %c0_13 = arith.constant 0 : index
    %16 = vector.load %arg9[%c0_12, %c0_13] : memref<8x128xf32, #tpu.memory_space<vmem>>, vector<8x128xf32>
    %17 = vector.shape_cast %10 : vector<16x128xf32> to vector<2x8x128xf32>
    %cst_14 = arith.constant dense<0.000000e+00> : vector<8x128xf32>
    %18 = vector.multi_reduction <add>, %17, %cst_14 [0] : vector<2x8x128xf32> to vector<8x128xf32>
    %19 = arith.addf %16, %18 : vector<8x128xf32>
    %c0_15 = arith.constant 0 : index
    %c0_16 = arith.constant 0 : index
    %20 = vector.load %arg9[%c0_15, %c0_16] : memref<8x128xf32, #tpu.memory_space<vmem>>, vector<8x128xf32>
    tpu.vector_store %arg9[%c0_15, %c0_16], %19 {strides = array<i32>} : memref<8x128xf32, #tpu.memory_space<vmem>>, vector<8x128xf32>,
    %c0_17 = arith.constant 0 : index
    %c0_18 = arith.constant 0 : index
    %21 = vector.load %arg5[%c0_17, %c0_18] : memref<8x128xf32, #tpu.memory_space<vmem>>, vector<8x128xf32>
    %c0_19 = arith.constant 0 : index
    %c0_20 = arith.constant 0 : index
    %22 = vector.load %arg6[%c0_19, %c0_20] : memref<8x128xf32, #tpu.memory_space<vmem>>, vector<8x128xf32>
    %cst_21 = arith.constant 0.000000e+00 : f32
    %23 = vector.broadcast %cst_21 : f32 to vector<8x128xf32>
    %24 = arith.maximumf %21, %23 : vector<8x128xf32>
    %25 = arith.mulf %21, %22 : vector<8x128xf32>
    %26 = arith.subf %24, %25 : vector<8x128xf32>
    %27 = math.absf %21 : vector<8x128xf32>
    %cst_22 = arith.constant 0.000000e+00 : f32
    %28 = vector.broadcast %cst_22 : f32 to vector<8x128xf32>
    %29 = arith.subf %28, %27 : vector<8x128xf32>
    %30 = math.exp %29 : vector<8x128xf32>
    %31 = math.log1p %30 : vector<8x128xf32>
    %32 = arith.addf %26, %31 : vector<8x128xf32>
    %c0_23 = arith.constant 0 : index
    %c0_24 = arith.constant 0 : index
    %33 = vector.load %arg10[%c0_23, %c0_24] : memref<8x128xf32, #tpu.memory_space<vmem>>, vector<8x128xf32>
    %34 = vector.shape_cast %32 : vector<8x128xf32> to vector<1x8x128xf32>
    %cst_25 = arith.constant dense<0.000000e+00> : vector<8x128xf32>
    %35 = vector.multi_reduction <add>, %34, %cst_25 [0] : vector<1x8x128xf32> to vector<8x128xf32>
    %36 = arith.addf %33, %35 : vector<8x128xf32>
    %c0_26 = arith.constant 0 : index
    %c0_27 = arith.constant 0 : index
    %37 = vector.load %arg10[%c0_26, %c0_27] : memref<8x128xf32, #tpu.memory_space<vmem>>, vector<8x128xf32>
    tpu.vector_store %arg10[%c0_26, %c0_27], %36 {strides = array<i32>} : memref<8x128xf32, #tpu.memory_space<vmem>>, vector<8x128xf32>,
    %c0_i32_28 = arith.constant 0 : i32
    %38 = arith.cmpi eq, %arg0, %c0_i32_28 : i32
    %39 = arith.extui %38 : i1 to i32
    %c0_i32_29 = arith.constant 0 : i32
    %40 = arith.cmpi ne, %39, %c0_i32_29 : i32
    scf.if %40 {
      %c0_30 = arith.constant 0 : index
      %c0_31 = arith.constant 0 : index
      %41 = vector.load %arg8[%c0_30, %c0_31] : memref<8x128xf32, #tpu.memory_space<vmem>>, vector<8x128xf32>
      %42 = vector.shape_cast %41 : vector<8x128xf32> to vector<1x8x128xf32>
      %cst_32 = arith.constant dense<0.000000e+00> : vector<1xf32>
      %43 = vector.multi_reduction <add>, %42, %cst_32 [1, 2] : vector<1x8x128xf32> to vector<1xf32>
      %44 = vector.shape_cast %43 : vector<1xf32> to vector<1x1x1xf32>
      %45 = vector.extract %44[0, 0, 0] : f32 from vector<1x1x1xf32>
      %c0_33 = arith.constant 0 : index
      %c0_34 = arith.constant 0 : index
      %46 = memref.load %arg7[%c0_33, %c0_34] : memref<1x3xf32, #tpu.memory_space<smem>>
      memref.store %45, %arg7[%c0_33, %c0_34] : memref<1x3xf32, #tpu.memory_space<smem>>
      %c0_35 = arith.constant 0 : index
      %c0_36 = arith.constant 0 : index
      %47 = vector.load %arg9[%c0_35, %c0_36] : memref<8x128xf32, #tpu.memory_space<vmem>>, vector<8x128xf32>
      %48 = vector.shape_cast %47 : vector<8x128xf32> to vector<1x8x128xf32>
      %cst_37 = arith.constant dense<0.000000e+00> : vector<1xf32>
      %49 = vector.multi_reduction <add>, %48, %cst_37 [1, 2] : vector<1x8x128xf32> to vector<1xf32>
      %50 = vector.shape_cast %49 : vector<1xf32> to vector<1x1x1xf32>
      %51 = vector.extract %50[0, 0, 0] : f32 from vector<1x1x1xf32>
      %c0_38 = arith.constant 0 : index
      %c1 = arith.constant 1 : index
      %52 = memref.load %arg7[%c0_38, %c1] : memref<1x3xf32, #tpu.memory_space<smem>>
      memref.store %51, %arg7[%c0_38, %c1] : memref<1x3xf32, #tpu.memory_space<smem>>
      %c0_39 = arith.constant 0 : index
      %c0_40 = arith.constant 0 : index
      %53 = vector.load %arg10[%c0_39, %c0_40] : memref<8x128xf32, #tpu.memory_space<vmem>>, vector<8x128xf32>
      %54 = vector.shape_cast %53 : vector<8x128xf32> to vector<1x8x128xf32>
      %cst_41 = arith.constant dense<0.000000e+00> : vector<1xf32>
      %55 = vector.multi_reduction <add>, %54, %cst_41 [1, 2] : vector<1x8x128xf32> to vector<1xf32>
      %56 = vector.shape_cast %55 : vector<1xf32> to vector<1x1x1xf32>
      %57 = vector.extract %56[0, 0, 0] : f32 from vector<1x1x1xf32>
      %c0_42 = arith.constant 0 : index
      %c2 = arith.constant 2 : index
      %58 = memref.load %arg7[%c0_42, %c2] : memref<1x3xf32, #tpu.memory_space<smem>>
      memref.store %57, %arg7[%c0_42, %c2] : memref<1x3xf32, #tpu.memory_space<smem>>
    } else {
    }
    return
  }
  func.func @transform_0(%arg0: i32) -> (i32, i32) {
    %c0_i32 = arith.constant 0 : i32
    %c0_i32_0 = arith.constant 0 : i32
    return %arg0, %c0_i32 : i32, i32
  }
  func.func @transform_1(%arg0: i32) -> (i32, i32) {
    %c0_i32 = arith.constant 0 : i32
    %c0_i32_0 = arith.constant 0 : i32
    return %arg0, %c0_i32 : i32, i32
  }
  func.func @transform_2(%arg0: i32) -> (i32, i32) {
    %c0_i32 = arith.constant 0 : i32
    %c0_i32_0 = arith.constant 0 : i32
    %c0_i32_1 = arith.constant 0 : i32
    return %c0_i32, %c0_i32_0 : i32, i32
  }
  func.func @transform_3(%arg0: i32) -> (i32, i32) {
    %c0_i32 = arith.constant 0 : i32
    %c0_i32_0 = arith.constant 0 : i32
    %c0_i32_1 = arith.constant 0 : i32
    return %c0_i32, %c0_i32_0 : i32, i32
  }
  func.func @transform_4(%arg0: i32) -> (i32, i32) {
    %c0_i32 = arith.constant 0 : i32
    %c0_i32_0 = arith.constant 0 : i32
    return %arg0, %c0_i32 : i32, i32
  }
  func.func @transform_5(%arg0: i32) -> (i32, i32) {
    %c0_i32 = arith.constant 0 : i32
    %c0_i32_0 = arith.constant 0 : i32
    return %arg0, %c0_i32 : i32, i32
  }
  func.func @transform_6(%arg0: i32) -> (i32, i32) {
    %c0_i32 = arith.constant 0 : i32
    %c0_i32_0 = arith.constant 0 : i32
    %c0_i32_1 = arith.constant 0 : i32
    return %c0_i32, %c0_i32_0 : i32, i32
  }
}

</mosaic_0001>

<llo_original>
// kernel: tpu_custom_call.1
$region0: #{tpu_custom_call.1}
  #allocation0 [shape = 'u32[]', space=smem, size = 0x4, offset = 0x4, fixed_abs, tag = 'smem constant byte address 0x4 - core index']
  #allocation1 [shape = 'u32[72,128]{1,0:T(1,128)}', space=vmem, size = 0x9000, scoped, tag = 'internal scratch']
  #allocation2 [shape = 'f32[8,128]{1,0:T(8,128)}', space=vmem, size = 0x1000, scoped, tag = 'scratch operand']
  #allocation3 [shape = 'f32[8,128]{1,0:T(8,128)}', space=vmem, size = 0x1000, scoped, tag = 'scratch operand']
  #allocation4 [shape = 'f32[8,128]{1,0:T(8,128)}', space=vmem, size = 0x1000, scoped, tag = 'scratch operand']
  %s0 = inlined_call_operand.hbm [shape: f32[16,128], index: 0, kind: input, shape index: {}]
  %s1 = inlined_call_operand.hbm [shape: f32[16,128], index: 1, kind: input, shape index: {}]
  %s2 = inlined_call_operand.hbm [shape: f32[16,128], index: 2, kind: input, shape index: {}]
  %s3 = inlined_call_operand.hbm [shape: f32[16,128], index: 3, kind: input, shape index: {}]
  %s4 = inlined_call_operand.hbm [shape: f32[8,128], index: 4, kind: input, shape index: {}]
  %s5 = inlined_call_operand.hbm [shape: f32[8,128], index: 5, kind: input, shape index: {}]
  %s6 = inlined_call_operand.hbm [shape: f32[1,3], index: 6, kind: output, shape index: {}]
  %s7 = sld [smem:[#allocation0]]
  $region66: #{tpu_custom_call.1} parent=0
    _
  %s9 = ssub.s32 1, %s7
  %s10 = scalar_select 0, %s9, %s7
  $region1: #{tpu_custom_call.1} parent=0
    #allocation5 [shape = 'u8[8192]{0}', space=vmem, size = 0x2000, scoped, tag = 'input window, operand 0, single buffered']
    #allocation6 [shape = 's32[1]{0}', space=sflag, size = 0x4, scoped, tag = 'scoped memory for tpu_custom_call.1']
    #allocation7 [shape = 's32[1]{0}', space=sflag, size = 0x4, scoped, tag = 'scoped memory for tpu_custom_call.1']
    #allocation8 [shape = 'u8[8192]{0}', space=vmem, size = 0x2000, scoped, tag = 'input window, operand 1, single buffered']
    #allocation9 [shape = 's32[1]{0}', space=sflag, size = 0x4, scoped, tag = 'scoped memory for tpu_custom_call.1']
    #allocation10 [shape = 'u8[8192]{0}', space=vmem, size = 0x2000, scoped, tag = 'input window, operand 2, single buffered']
    #allocation11 [shape = 'u8[8192]{0}', space=vmem, size = 0x2000, scoped, tag = 'input window, operand 3, single buffered']
    #allocation12 [shape = 's32[1]{0}', space=sflag, size = 0x4, scoped, tag = 'scoped memory for tpu_custom_call.1']
    #allocation13 [shape = 'u8[4096]{0}', space=vmem, size = 0x1000, scoped, tag = 'input window, operand 4, single buffered']
    #allocation14 [shape = 'u8[4096]{0}', space=vmem, size = 0x1000, scoped, tag = 'input window, operand 5, single buffered']
    #allocation15 [shape = 's32[1]{0}', space=sflag, size = 0x4, scoped, tag = 'scoped memory for tpu_custom_call.1']
    #allocation16 [shape = 'u8[512]{0}', space=smem, size = 0x200, scoped, tag = 'output window, operand 0, single buffered']
    %11 = vsyncpa [#allocation6], 0
    %12 = vsyncpa [#allocation9], 0
    %13 = vsyncpa [#allocation12], 0
    %14 = vsyncpa [#allocation15], 0
    %15 = vsyncpa [#allocation7], 0
    // Predicated region
    $region2: #{tpu_custom_call.1} parent=1 // pred_check
      _
    $region3: #{tpu_custom_call.1} parent=1 // pred_check_branch
      %17 = sbr.rel (0) target = $region5
    $region4: #{tpu_custom_call.1} parent=1 // pred_region
      %19 = vsyncadd [#allocation6], 0
      %s20 = sshll.u32 %s0, 4
      %s21 = int_to_ptr.hbm [resolvable:$true] %s20
      %s22 = sshll.u32 [#allocation5], 4
      %s23 = int_to_ptr.vmem [resolvable:$true] %s22
      %28 = dma.hbm_to_vmem [thread:$0]  %s21, 256, %s23, [#allocation6], 128, 128, 8
    $region5: #{tpu_custom_call.1} parent=1 // pred_fallthru
      _
    // Predicated region
    $region6: #{tpu_custom_call.1} parent=1 // pred_check
      _
    $region7: #{tpu_custom_call.1} parent=1 // pred_check_branch
      %30 = sbr.rel (0) target = $region9
    $region8: #{tpu_custom_call.1} parent=1 // pred_region
      %32 = vsyncadd [#allocation9], 0
      %s33 = sshll.u32 %s1, 4
      %s34 = int_to_ptr.hbm [resolvable:$true] %s33
      %s35 = sshll.u32 [#allocation8], 4
      %s36 = int_to_ptr.vmem [resolvable:$true] %s35
      %41 = dma.hbm_to_vmem [thread:$0]  %s34, 256, %s36, [#allocation9], 128, 128, 8
    $region9: #{tpu_custom_call.1} parent=1 // pred_fallthru
      _
    // Predicated region
    $region10: #{tpu_custom_call.1} parent=1 // pred_check
      _
    $region11: #{tpu_custom_call.1} parent=1 // pred_check_branch
      %43 = sbr.rel (0) target = $region13
    $region12: #{tpu_custom_call.1} parent=1 // pred_region
      %45 = vsyncadd [#allocation9], 0
      %s46 = sshll.u32 %s2, 4
      %s47 = int_to_ptr.hbm [resolvable:$true] %s46
      %s48 = sshll.u32 [#allocation10], 4
      %s49 = int_to_ptr.vmem [resolvable:$true] %s48
      %54 = dma.hbm_to_vmem [thread:$0]  %s47, 256, %s49, [#allocation9], 128, 128, 8
    $region13: #{tpu_custom_call.1} parent=1 // pred_fallthru
      _
    // Predicated region
    $region14: #{tpu_custom_call.1} parent=1 // pred_check
      _
    $region15: #{tpu_custom_call.1} parent=1 // pred_check_branch
      %56 = sbr.rel (0) target = $region17
    $region16: #{tpu_custom_call.1} parent=1 // pred_region
      %58 = vsyncadd [#allocation12], 0
      %s59 = sshll.u32 %s3, 4
      %s60 = int_to_ptr.hbm [resolvable:$true] %s59
      %s61 = sshll.u32 [#allocation11], 4
      %s62 = int_to_ptr.vmem [resolvable:$true] %s61
      %67 = dma.hbm_to_vmem [thread:$0]  %s60, 256, %s62, [#allocation12], 128, 128, 8
    $region17: #{tpu_custom_call.1} parent=1 // pred_fallthru
      _
    // Predicated region
    $region18: #{tpu_custom_call.1} parent=1 // pred_check
      _
    $region19: #{tpu_custom_call.1} parent=1 // pred_check_branch
      %69 = sbr.rel (0) target = $region21
    $region20: #{tpu_custom_call.1} parent=1 // pred_region
      %71 = vsyncadd [#allocation12], 0
      %s73 = sshll.u32 %s4, 4
      %s74 = int_to_ptr.hbm [resolvable:$true] %s73
      %s75 = sshll.u32 [#allocation13], 4
      %s76 = int_to_ptr.vmem [resolvable:$true] %s75
      %78 = dma.hbm_to_vmem [thread:$0]  %s74, 128, %s76, [#allocation12]
    $region21: #{tpu_custom_call.1} parent=1 // pred_fallthru
      _
    // Predicated region
    $region22: #{tpu_custom_call.1} parent=1 // pred_check
      _
    $region23: #{tpu_custom_call.1} parent=1 // pred_check_branch
      %80 = sbr.rel (0) target = $region25
    $region24: #{tpu_custom_call.1} parent=1 // pred_region
      %82 = vsyncadd [#allocation15], 0
      %s84 = sshll.u32 %s5, 4
      %s85 = int_to_ptr.hbm [resolvable:$true] %s84
      %s86 = sshll.u32 [#allocation14], 4
      %s87 = int_to_ptr.vmem [resolvable:$true] %s86
      %89 = dma.hbm_to_vmem [thread:$0]  %s85, 128, %s87, [#allocation15]
    $region25: #{tpu_custom_call.1} parent=1 // pred_fallthru
      _
    // Predicated region
    $region26: #{tpu_custom_call.1} parent=1 // pred_check
      _
    $region27: #{tpu_custom_call.1} parent=1 // pred_check_branch
      %91 = sbr.rel (0) target = $region29
    $region28: #{tpu_custom_call.1} parent=1 // pred_region
      %93 = dma.done [#allocation6], 256
    $region29: #{tpu_custom_call.1} parent=1 // pred_fallthru
      _
    // Predicated region
    $region30: #{tpu_custom_call.1} parent=1 // pred_check
      _
    $region31: #{tpu_custom_call.1} parent=1 // pred_check_branch
      %95 = sbr.rel (0) target = $region33
    $region32: #{tpu_custom_call.1} parent=1 // pred_region
      %97 = dma.done [#allocation9], 256
    $region33: #{tpu_custom_call.1} parent=1 // pred_fallthru
      _
    // Predicated region
    $region34: #{tpu_custom_call.1} parent=1 // pred_check
      _
    $region35: #{tpu_custom_call.1} parent=1 // pred_check_branch
      %99 = sbr.rel (0) target = $region37
    $region36: #{tpu_custom_call.1} parent=1 // pred_region
      %101 = dma.done [#allocation9], 256
    $region37: #{tpu_custom_call.1} parent=1 // pred_fallthru
      _
    // Predicated region
    $region38: #{tpu_custom_call.1} parent=1 // pred_check
      _
    $region39: #{tpu_custom_call.1} parent=1 // pred_check_branch
      %103 = sbr.rel (0) target = $region41
    $region40: #{tpu_custom_call.1} parent=1 // pred_region
      %105 = dma.done [#allocation12], 256
    $region41: #{tpu_custom_call.1} parent=1 // pred_fallthru
      _
    // Predicated region
    $region42: #{tpu_custom_call.1} parent=1 // pred_check
      _
    $region43: #{tpu_custom_call.1} parent=1 // pred_check_branch
      %107 = sbr.rel (0) target = $region45
    $region44: #{tpu_custom_call.1} parent=1 // pred_region
      %109 = dma.done [#allocation12], 128
    $region45: #{tpu_custom_call.1} parent=1 // pred_fallthru
      _
    // Predicated region
    $region46: #{tpu_custom_call.1} parent=1 // pred_check
      _
    $region47: #{tpu_custom_call.1} parent=1 // pred_check_branch
      %111 = sbr.rel (0) target = $region49
    $region48: #{tpu_custom_call.1} parent=1 // pred_region
      %113 = dma.done [#allocation15], 128
    $region49: #{tpu_custom_call.1} parent=1 // pred_fallthru
      _
    %p114 = scmp.eq.s32.totalorder 0, 0
    // Predicated region
    $region50: #{tpu_custom_call.1} parent=1 // pred_check
      %p115 = pneg %p114
    $region51: #{tpu_custom_call.1} parent=1 // pred_check_branch
      %117 = sbr.rel (%p115) target = $region53
    $region52: #{tpu_custom_call.1} parent=1 // pred_region
      %118 = vst [vmem:[#allocation2] sm:$0xff] 0.0
      %119 = vst [vmem:[#allocation3] sm:$0xff] 0.0
      %120 = vst [vmem:[#allocation4] sm:$0xff] 0.0
    $region53: #{tpu_custom_call.1} parent=1 // pred_fallthru
      _
    %v121 = vld [vmem:[#allocation5] sm:$0xff]
    %v122 = vld [vmem:[#allocation5 + $0x8] sm:$0xff]
    %v123 = vld [vmem:[#allocation8] sm:$0xff]
    %v124 = vld [vmem:[#allocation8 + $0x8] sm:$0xff]
    %v125 = vsub.f32 %v121, %v123
    %v126 = vsub.f32 %v122, %v124
    %v127 = vmul.f32 %v125, %v125
    %v128 = vmul.f32 %v126, %v126
    %v129 = vld [vmem:[#allocation11] sm:$0xff]
    %v130 = vld [vmem:[#allocation11 + $0x8] sm:$0xff]
    %v131 = vmul.f32 %v127, %v129
    %v132 = vmul.f32 %v128, %v130
    %v133 = vld [vmem:[#allocation10] sm:$0xff]
    %v134 = vld [vmem:[#allocation10 + $0x8] sm:$0xff]
    %v135 = vmul.f32 %v127, %v133
    %v136 = vmul.f32 %v128, %v134
    %v137 = vld [vmem:[#allocation2] sm:$0xff]
    %v138 = vadd.f32 %v131, %v132
    %v139 = vadd.f32 %v137, %v138
    %140 = vst [vmem:[#allocation2] sm:$0xff] %v139
    %v141 = vld [vmem:[#allocation3] sm:$0xff]
    %v142 = vadd.f32 %v135, %v136
    %v143 = vadd.f32 %v141, %v142
    %144 = vst [vmem:[#allocation3] sm:$0xff] %v143
    %v145 = vld [vmem:[#allocation13] sm:$0xff]
    %v146 = vld [vmem:[#allocation14] sm:$0xff]
    %v147 = vmax.f32 %v145, 0.0
    %v148 = vmul.f32 %v145, %v146
    %v149 = vsub.f32 %v147, %v148
    %v150 = vand.u32 2147483647, %v145
    %v151 = vsub.f32 0.0, %v150
    %v152 = vmul.f32 %v151, 1.442695
    %v153 = vpow.pop %v152
    %v154 = vadd.f32 %v153, 1.0
    %v155 = vlog2.pop %v154
    %v156 = vmul.f32 %v155, 0.6931472
    %v157 = vmul.f32 -0.5, %v153
    %v158 = vadd.f32 %v157, 1.0
    %v159 = vmul.f32 %v158, %v153
    %v160 = vand.u32 2147483647, %v153
    %vm161 = vcmp.lt.f32.partialorder %v160, 0.0004427343
    %v162 = vsel %vm161, %v159, %v156
    %v163 = vadd.f32 %v149, %v162
    %v164 = vld [vmem:[#allocation4] sm:$0xff]
    %v165 = vadd.f32 %v163, 0.0
    %v166 = vadd.f32 %v164, %v165
    %167 = vst [vmem:[#allocation4] sm:$0xff] %v166
    // Predicated region
    $region54: #{tpu_custom_call.1} parent=1 // pred_check
      %p168 = pneg %p114
    $region55: #{tpu_custom_call.1} parent=1 // pred_check_branch
      %170 = sbr.rel (%p168) target = $region57
    $region56: #{tpu_custom_call.1} parent=1 // pred_region
      %v171 = vld [vmem:[#allocation2] sm:$0xff]
      %172 = vadd.xlane.f32.xlu0 %v171
      %v173 = vpop.xlane.xlu0 %172
      %v174 = vrot.slane %v173, 4
      %v175 = vadd.f32 %v173, %v174
      %v176 = vrot.slane %v175, 2
      %v177 = vadd.f32 %v175, %v176
      %v178 = vrot.slane %v177, 1
      %v179 = vadd.f32 %v177, %v178
      %s180 = vtos %v179
      %s181 = scalar_lea.smem [#allocation16], 0
      %182 = sst [smem:[%s181]] %s180
      %v183 = vld [vmem:[#allocation3] sm:$0xff]
      %184 = vadd.xlane.f32.xlu0 %v183
      %v185 = vpop.xlane.xlu0 %184
      %v186 = vrot.slane %v185, 4
      %v187 = vadd.f32 %v185, %v186
      %v188 = vrot.slane %v187, 2
      %v189 = vadd.f32 %v187, %v188
      %v190 = vrot.slane %v189, 1
      %v191 = vadd.f32 %v189, %v190
      %s192 = vtos %v191
      %s193 = scalar_lea.smem [#allocation16], 1
      %194 = sst [smem:[%s193]] %s192
      %v195 = vld [vmem:[#allocation4] sm:$0xff]
      %196 = vadd.xlane.f32.xlu0 %v195
      %v197 = vpop.xlane.xlu0 %196
      %v198 = vrot.slane %v197, 4
      %v199 = vadd.f32 %v197, %v198
      %v200 = vrot.slane %v199, 2
      %v201 = vadd.f32 %v199, %v200
      %v202 = vrot.slane %v201, 1
      %v203 = vadd.f32 %v201, %v202
      %s204 = vtos %v203
      %s205 = scalar_lea.smem [#allocation16], 2
      %206 = sst [smem:[%s205]] %s204
    $region57: #{tpu_custom_call.1} parent=1 // pred_fallthru
      _
    // Predicated region
    $region58: #{tpu_custom_call.1} parent=1 // pred_check
      _
    $region59: #{tpu_custom_call.1} parent=1 // pred_check_branch
      %208 = sbr.rel (0) target = $region61
    $region60: #{tpu_custom_call.1} parent=1 // pred_region
      %210 = vsyncadd [#allocation7], 0
      %s212 = sshll.u32 %s6, 4
      %s213 = int_to_ptr.hbm [resolvable:$true] %s212
      %215 = dma.smem_to_hbm [#allocation16], 16, %s213, [#allocation7]
    $region61: #{tpu_custom_call.1} parent=1 // pred_fallthru
      _
    // Predicated region
    $region62: #{tpu_custom_call.1} parent=1 // pred_check
      _
    $region63: #{tpu_custom_call.1} parent=1 // pred_check_branch
      %217 = sbr.rel (0) target = $region65
    $region64: #{tpu_custom_call.1} parent=1 // pred_region
      %219 = dma.done [#allocation7], 16
    $region65: #{tpu_custom_call.1} parent=1 // pred_fallthru
      _
    %220 = sfence
    %221 = vsyncpa [#allocation6], 1
    %222 = vsyncpa [#allocation9], 1
    %223 = vsyncpa [#allocation12], 1
    %224 = vsyncpa [#allocation15], 1
    %225 = vsyncpa [#allocation7], 1

</llo_original>
